<compile_context>
chip_gen: v7x
topology: tpu7x:2x2x1
jax: 0.10.0
libtpu: 0.0.40
codegen_flags: <defaults>
</compile_context>

<pallas_src>
import jax
import jax.numpy as jnp
from jax.experimental import pallas as pl
from jax.experimental.pallas import tpu as pltpu


EPS = 1e-5  # nn.InstanceNorm2d default eps (affine=False -> no scale/shift)


def _round_up(x, m):
    return ((x + m - 1) // m) * m


def _make_kernel(C, H, W, L, Cs):
    """Fused (reflect-pad conv3x3 + InstanceNorm) x2 for one sample.

    Layout: every image lives as a (C, L) tile; lane p < Hp*Wp is the
    flattened padded pixel (p // Wp, p % Wp); lanes >= Hp*Wp are zero/junk
    (always finite, always masked out of the statistics).
    """
    Hp, Wp = H + 2, W + 2
    inv_n = 1.0 / float(H * W)
    tap_off = [dy * Wp + dx for dy in range(3) for dx in range(3)]  # t = 3*dy+dx
    f32 = jnp.float32

    def kernel(xp_ref, w1_ref, w2_ref, out_ref, stack_ref):
        # ---- in-kernel lane coordinates & validity mask (no mask DMA). -----
        # row/col via f32 floor-division: exact for these magnitudes (lane and
        # Wp are small exact f32 integers; non-integer quotients sit >= 1/Wp
        # away from the next integer, far beyond f32 rounding error).  Avoids
        # vector integer div/mod.
        lane_f = jax.lax.broadcasted_iota(jnp.int32, (1, L), 1).astype(f32)
        row_f = jnp.floor(lane_f / float(Wp))          # padded-image row
        col_f = lane_f - row_f * float(Wp)             # padded-image column
        # Band position r = y*Wp + x is a real output pixel iff x < W, y < H.
        mask = jnp.where((col_f < float(W)) & (row_f < float(H)), 1.0, 0.0)

        def shifted(src, off):
            # result[:, p] = src[:, (p + off) % L]   (lane rotate, XLU slot)
            return pltpu.roll(src, (-off) % L, axis=1)

        def build_stack(src):
            # Stack the 9 tap windows along sublanes -> (9*Cs, L) operand so
            # the conv is ONE K=9*Cs matmul.  Stores start at multiples of 8
            # (Cs-aligned) -> no relayout.
            for t in range(9):
                stack_ref[pl.ds(t * Cs, C), :] = shifted(src, tap_off[t])

        def instance_norm(z):
            # Fused masked moments: single elementwise pass over the tile.
            # (Single-pass E[x^2]-E[x]^2 is fine in f32 at these magnitudes;
            #  switch to a shifted/two-pass form if operands move to bf16.)
            zm = z * mask
            s1 = jnp.sum(zm, axis=1, keepdims=True)        # (C, 1)
            s2 = jnp.sum(zm * z, axis=1, keepdims=True)    # (C, 1)
            mean = s1 * inv_n
            var = jnp.maximum(s2 * inv_n - mean * mean, 0.0)
            return (z - mean) * jax.lax.rsqrt(var + EPS)

        # Dead sublane rows of the stacked operand (channel pad C..Cs) have
        # zero weights but must be finite; zero them every step (cheap,
        # megacore-safe, skipped entirely when C is already a multiple of 8).
        if Cs != C:
            dead = jnp.zeros((Cs - C, L), f32)
            for t in range(9):
                stack_ref[pl.ds(t * Cs + C, Cs - C), :] = dead

        # ----- layer 1: conv3x3 as one (C,9Cs)@(9Cs,L) matmul + InstanceNorm.
        build_stack(xp_ref[...])
        z1 = jnp.dot(w1_ref[...], stack_ref[...],
                     preferred_element_type=f32)           # (C, L)
        # (conv bias omitted: exactly cancelled by the IN mean subtraction)
        y1 = instance_norm(z1)

        # ----- inter-layer ReflectionPad2d(1), functional (rolls + selects) -
        # interior: padded pixel q=(py,px) takes y1 at (py-1,px-1) = q-(Wp+1)
        ypA = shifted(y1, -(Wp + 1))
        # columns: col 0 <- col 2 ; col Wp-1 <- col Wp-3
        ypB = jnp.where(col_f == 0.0, shifted(ypA, 2),
                        jnp.where(col_f == float(Wp - 1), shifted(ypA, -2),
                                  ypA))
        # rows (after columns so corners reflect): row 0 <- row 2 ;
        # row Hp-1 <- row Hp-3
        yp = jnp.where(row_f == 0.0, shifted(ypB, 2 * Wp),
                       jnp.where(row_f == float(Hp - 1), shifted(ypB, -2 * Wp),
                                 ypB))

        # ----- layer 2: conv3x3 + InstanceNorm, lane-dense output store -----
        build_stack(yp)
        z2 = jnp.dot(w2_ref[...], stack_ref[...],
                     preferred_element_type=f32)           # (C, L)
        out_ref[...] = instance_norm(z2).astype(out_ref.dtype)

    return kernel


@jax.jit
def resnet_block_forward(x, w1, b1, w2, b2):
    """ResnetBlock forward.  x: (N, C, H, W) f32 -> (N, C, H, W) f32.

    b1/b2 are accepted for interface parity with the PyTorch module but are
    unused: a per-channel bias before InstanceNorm2d(affine=False) is exactly
    cancelled by the mean subtraction (the reference keeps them to show the
    equivalence).
    """
    del b1, b2
    N, C, H, W = x.shape
    Hp, Wp = H + 2, W + 2
    P = Hp * Wp
    L = _round_up(P, 128)      # flat lane width: >= padded image, lane-dense
    Cs = _round_up(C, 8)       # sublane-aligned per-tap channel stride

    # --- layout glue (cheap, transpose-free): reflect-pad, flatten, lane-pad.
    xp = jnp.pad(x, ((0, 0), (0, 0), (1, 1), (1, 1)), mode="reflect")
    xp = xp.reshape(N, C, P)
    xp = jnp.pad(xp, ((0, 0), (0, 0), (0, L - P)))          # (N, C, L)

    # Weights -> (C_out, 9*Cs): K index = t*Cs + ci, t = 3*dy + dx.
    def flatten_w(w):
        wt = jnp.transpose(w, (0, 2, 3, 1)).reshape(C, 9, C)     # [co, t, ci]
        wt = jnp.pad(wt, ((0, 0), (0, 0), (0, Cs - C)))
        return wt.reshape(C, 9 * Cs)

    w1m = flatten_w(w1)
    w2m = flatten_w(w2)

    out_band = pl.pallas_call(
        _make_kernel(C, H, W, L, Cs),
        out_shape=jax.ShapeDtypeStruct((N, C, L), jnp.float32),
        grid=(N,),
        in_specs=[
            pl.BlockSpec((None, C, L), lambda n: (n, 0, 0)),
            pl.BlockSpec((C, 9 * Cs), lambda n: (0, 0)),
            pl.BlockSpec((C, 9 * Cs), lambda n: (0, 0)),
        ],
        out_specs=pl.BlockSpec((None, C, L), lambda n: (n, 0, 0)),
        scratch_shapes=[pltpu.VMEM((9 * Cs, L), jnp.float32)],
        compiler_params=pltpu.CompilerParams(
            dimension_semantics=("parallel",)),
    )(xp, w1m, w2m)

    # Band -> NCHW: lanes are already (row, col) row-major with stride Wp, so
    # this is a pure reshape + column slice (no transpose).
    out = out_band[:, :, :H * Wp].reshape(N, C, H, Wp)
    return out[:, :, :, :W]


def _reference_forward(x, w1, b1, w2, b2):
    """Pure-JAX reference mirroring the PyTorch module, for verification."""
    def layer(h, w, b):
        hp = jnp.pad(h, ((0, 0), (0, 0), (1, 1), (1, 1)), mode="reflect")
        y = jax.lax.conv_general_dilated(
            hp, w, window_strides=(1, 1), padding="VALID",
            dimension_numbers=("NCHW", "OIHW", "NCHW"))
        y = y + b[None, :, None, None]
        mean = y.mean(axis=(2, 3), keepdims=True)
        var = ((y - mean) ** 2).mean(axis=(2, 3), keepdims=True)
        return (y - mean) * jax.lax.rsqrt(var + EPS)
    return layer(layer(x, w1, b1), w2, b2)


if __name__ == "__main__":
    # Small shapes consistent with the module: batch=2, channels=4, 16x16.
    N, C, H, W = 2, 4, 16, 16

    key = jax.random.PRNGKey(0)
    kx, kw1, kb1, kw2, kb2 = jax.random.split(key, 5)

    x = jax.random.normal(kx, (N, C, H, W), dtype=jnp.float32)
    # Deterministic synthetic conv params (Conv2d(C, C, 3) with bias).
    w1 = jax.random.normal(kw1, (C, C, 3, 3), dtype=jnp.float32) * 0.1
    b1 = jax.random.normal(kb1, (C,), dtype=jnp.float32) * 0.1
    w2 = jax.random.normal(kw2, (C, C, 3, 3), dtype=jnp.float32) * 0.1
    b2 = jax.random.normal(kb2, (C,), dtype=jnp.float32) * 0.1

    out = resnet_block_forward(x, w1, b1, w2, b2)
    out = jax.block_until_ready(out)

    ref = jax.block_until_ready(_reference_forward(x, w1, b1, w2, b2))
    assert out.shape == (N, C, H, W)
    assert jnp.allclose(out, ref, rtol=2e-4, atol=2e-4), (
        "Pallas ResnetBlock mismatch vs reference")

    print("KERNEL_OK")
</pallas_src>

<mosaic_0001>
module attributes {stable_mosaic.version = 11 : i64} {
  func.func @kernel(%arg0: i32, %arg1: memref<1x4x384xf32, #tpu.memory_space<vmem>>, %arg2: memref<4x72xf32, #tpu.memory_space<vmem>>, %arg3: memref<4x72xf32, #tpu.memory_space<vmem>>, %arg4: memref<1x4x384xf32, #tpu.memory_space<vmem>>, %arg5: memref<72x384xf32, #tpu.memory_space<vmem>>) attributes {dimension_semantics = [#tpu.dimension_semantics<parallel>], iteration_bounds = array<i64: 2>, scalar_prefetch = 0 : i64, scratch_operands = 1 : i64, tpu.core_type = #tpu.core_type<tc>, window_params = [{transform_indices = @transform_0, window_bounds = array<i64: 1, 4, 384>}, {pipeline_mode = #tpu.pipeline_mode<synchronous>, transform_indices = @transform_1, window_bounds = array<i64: 4, 72>}, {pipeline_mode = #tpu.pipeline_mode<synchronous>, transform_indices = @transform_2, window_bounds = array<i64: 4, 72>}, {transform_indices = @transform_3, window_bounds = array<i64: 1, 4, 384>}]} {
    %0 = tpu.iota {dimensions = array<i32: 1>} : vector<1x384xi32>
    %1 = arith.sitofp %0 : vector<1x384xi32> to vector<1x384xf32>
    %cst = arith.constant 1.800000e+01 : f32
    %2 = vector.broadcast %cst : f32 to vector<1x384xf32>
    %3 = arith.divf %1, %2 : vector<1x384xf32>
    %4 = math.floor %3 : vector<1x384xf32>
    %cst_0 = arith.constant 1.800000e+01 : f32
    %5 = vector.broadcast %cst_0 : f32 to vector<1x384xf32>
    %6 = arith.mulf %4, %5 : vector<1x384xf32>
    %7 = arith.subf %1, %6 : vector<1x384xf32>
    %cst_1 = arith.constant 1.600000e+01 : f32
    %8 = vector.broadcast %cst_1 : f32 to vector<1x384xf32>
    %9 = arith.cmpf olt, %7, %8 : vector<1x384xf32>
    %cst_2 = arith.constant 1.600000e+01 : f32
    %10 = vector.broadcast %cst_2 : f32 to vector<1x384xf32>
    %11 = arith.cmpf olt, %4, %10 : vector<1x384xf32>
    %12 = arith.andi %9, %11 : vector<1x384xi1>
    %cst_3 = arith.constant 1.000000e+00 : f32
    %cst_4 = arith.constant 0.000000e+00 : f32
    %13 = vector.broadcast %cst_3 : f32 to vector<1x384xf32>
    %14 = vector.broadcast %cst_4 : f32 to vector<1x384xf32>
    %15 = arith.select %12, %13, %14 : vector<1x384xi1>, vector<1x384xf32>
    %cst_5 = arith.constant 0.000000e+00 : f32
    %16 = vector.broadcast %cst_5 : f32 to vector<4x384xf32>
    %c4 = arith.constant 4 : index
    %c0 = arith.constant 0 : index
    %17 = vector.load %arg5[%c4, %c0] : memref<72x384xf32, #tpu.memory_space<vmem>>, vector<4x384xf32>
    tpu.vector_store %arg5[%c4, %c0], %16 {strides = array<i32>} : memref<72x384xf32, #tpu.memory_space<vmem>>, vector<4x384xf32>,
    %c12 = arith.constant 12 : index
    %c0_6 = arith.constant 0 : index
    %18 = vector.load %arg5[%c12, %c0_6] : memref<72x384xf32, #tpu.memory_space<vmem>>, vector<4x384xf32>
    tpu.vector_store %arg5[%c12, %c0_6], %16 {strides = array<i32>} : memref<72x384xf32, #tpu.memory_space<vmem>>, vector<4x384xf32>,
    %c20 = arith.constant 20 : index
    %c0_7 = arith.constant 0 : index
    %19 = vector.load %arg5[%c20, %c0_7] : memref<72x384xf32, #tpu.memory_space<vmem>>, vector<4x384xf32>
    tpu.vector_store %arg5[%c20, %c0_7], %16 {strides = array<i32>} : memref<72x384xf32, #tpu.memory_space<vmem>>, vector<4x384xf32>,
    %c28 = arith.constant 28 : index
    %c0_8 = arith.constant 0 : index
    %20 = vector.load %arg5[%c28, %c0_8] : memref<72x384xf32, #tpu.memory_space<vmem>>, vector<4x384xf32>
    tpu.vector_store %arg5[%c28, %c0_8], %16 {strides = array<i32>} : memref<72x384xf32, #tpu.memory_space<vmem>>, vector<4x384xf32>,
    %c36 = arith.constant 36 : index
    %c0_9 = arith.constant 0 : index
    %21 = vector.load %arg5[%c36, %c0_9] : memref<72x384xf32, #tpu.memory_space<vmem>>, vector<4x384xf32>
    tpu.vector_store %arg5[%c36, %c0_9], %16 {strides = array<i32>} : memref<72x384xf32, #tpu.memory_space<vmem>>, vector<4x384xf32>,
    %c44 = arith.constant 44 : index
    %c0_10 = arith.constant 0 : index
    %22 = vector.load %arg5[%c44, %c0_10] : memref<72x384xf32, #tpu.memory_space<vmem>>, vector<4x384xf32>
    tpu.vector_store %arg5[%c44, %c0_10], %16 {strides = array<i32>} : memref<72x384xf32, #tpu.memory_space<vmem>>, vector<4x384xf32>,
    %c52 = arith.constant 52 : index
    %c0_11 = arith.constant 0 : index
    %23 = vector.load %arg5[%c52, %c0_11] : memref<72x384xf32, #tpu.memory_space<vmem>>, vector<4x384xf32>
    tpu.vector_store %arg5[%c52, %c0_11], %16 {strides = array<i32>} : memref<72x384xf32, #tpu.memory_space<vmem>>, vector<4x384xf32>,
    %c60 = arith.constant 60 : index
    %c0_12 = arith.constant 0 : index
    %24 = vector.load %arg5[%c60, %c0_12] : memref<72x384xf32, #tpu.memory_space<vmem>>, vector<4x384xf32>
    tpu.vector_store %arg5[%c60, %c0_12], %16 {strides = array<i32>} : memref<72x384xf32, #tpu.memory_space<vmem>>, vector<4x384xf32>,
    %c68 = arith.constant 68 : index
    %c0_13 = arith.constant 0 : index
    %25 = vector.load %arg5[%c68, %c0_13] : memref<72x384xf32, #tpu.memory_space<vmem>>, vector<4x384xf32>
    tpu.vector_store %arg5[%c68, %c0_13], %16 {strides = array<i32>} : memref<72x384xf32, #tpu.memory_space<vmem>>, vector<4x384xf32>,
    %c0_14 = arith.constant 0 : index
    %c0_15 = arith.constant 0 : index
    %c0_16 = arith.constant 0 : index
    %26 = vector.load %arg1[%c0_14, %c0_15, %c0_16] : memref<1x4x384xf32, #tpu.memory_space<vmem>>, vector<1x4x384xf32>
    %27 = vector.shape_cast %26 : vector<1x4x384xf32> to vector<4x384xf32>
    %c0_i32 = arith.constant 0 : i32
    %28 = tpu.dynamic_rotate %27 by %c0_i32 dim 1 : vector<4x384xf32>, i32 -> vector<4x384xf32>
    %c0_17 = arith.constant 0 : index
    %c0_18 = arith.constant 0 : index
    %29 = vector.load %arg5[%c0_17, %c0_18] : memref<72x384xf32, #tpu.memory_space<vmem>>, vector<4x384xf32>
    tpu.vector_store %arg5[%c0_17, %c0_18], %28 {strides = array<i32>} : memref<72x384xf32, #tpu.memory_space<vmem>>, vector<4x384xf32>,
    %c383_i32 = arith.constant 383 : i32
    %30 = tpu.dynamic_rotate %27 by %c383_i32 dim 1 : vector<4x384xf32>, i32 -> vector<4x384xf32>
    %c8 = arith.constant 8 : index
    %c0_19 = arith.constant 0 : index
    %31 = vector.load %arg5[%c8, %c0_19] : memref<72x384xf32, #tpu.memory_space<vmem>>, vector<4x384xf32>
    tpu.vector_store %arg5[%c8, %c0_19], %30 {strides = array<i32>} : memref<72x384xf32, #tpu.memory_space<vmem>>, vector<4x384xf32>,
    %c382_i32 = arith.constant 382 : i32
    %32 = tpu.dynamic_rotate %27 by %c382_i32 dim 1 : vector<4x384xf32>, i32 -> vector<4x384xf32>
    %c16 = arith.constant 16 : index
    %c0_20 = arith.constant 0 : index
    %33 = vector.load %arg5[%c16, %c0_20] : memref<72x384xf32, #tpu.memory_space<vmem>>, vector<4x384xf32>
    tpu.vector_store %arg5[%c16, %c0_20], %32 {strides = array<i32>} : memref<72x384xf32, #tpu.memory_space<vmem>>, vector<4x384xf32>,
    %c366_i32 = arith.constant 366 : i32
    %34 = tpu.dynamic_rotate %27 by %c366_i32 dim 1 : vector<4x384xf32>, i32 -> vector<4x384xf32>
    %c24 = arith.constant 24 : index
    %c0_21 = arith.constant 0 : index
    %35 = vector.load %arg5[%c24, %c0_21] : memref<72x384xf32, #tpu.memory_space<vmem>>, vector<4x384xf32>
    tpu.vector_store %arg5[%c24, %c0_21], %34 {strides = array<i32>} : memref<72x384xf32, #tpu.memory_space<vmem>>, vector<4x384xf32>,
    %c365_i32 = arith.constant 365 : i32
    %36 = tpu.dynamic_rotate %27 by %c365_i32 dim 1 : vector<4x384xf32>, i32 -> vector<4x384xf32>
    %c32 = arith.constant 32 : index
    %c0_22 = arith.constant 0 : index
    %37 = vector.load %arg5[%c32, %c0_22] : memref<72x384xf32, #tpu.memory_space<vmem>>, vector<4x384xf32>
    tpu.vector_store %arg5[%c32, %c0_22], %36 {strides = array<i32>} : memref<72x384xf32, #tpu.memory_space<vmem>>, vector<4x384xf32>,
    %c364_i32 = arith.constant 364 : i32
    %38 = tpu.dynamic_rotate %27 by %c364_i32 dim 1 : vector<4x384xf32>, i32 -> vector<4x384xf32>
    %c40 = arith.constant 40 : index
    %c0_23 = arith.constant 0 : index
    %39 = vector.load %arg5[%c40, %c0_23] : memref<72x384xf32, #tpu.memory_space<vmem>>, vector<4x384xf32>
    tpu.vector_store %arg5[%c40, %c0_23], %38 {strides = array<i32>} : memref<72x384xf32, #tpu.memory_space<vmem>>, vector<4x384xf32>,
    %c348_i32 = arith.constant 348 : i32
    %40 = tpu.dynamic_rotate %27 by %c348_i32 dim 1 : vector<4x384xf32>, i32 -> vector<4x384xf32>
    %c48 = arith.constant 48 : index
    %c0_24 = arith.constant 0 : index
    %41 = vector.load %arg5[%c48, %c0_24] : memref<72x384xf32, #tpu.memory_space<vmem>>, vector<4x384xf32>
    tpu.vector_store %arg5[%c48, %c0_24], %40 {strides = array<i32>} : memref<72x384xf32, #tpu.memory_space<vmem>>, vector<4x384xf32>,
    %c347_i32 = arith.constant 347 : i32
    %42 = tpu.dynamic_rotate %27 by %c347_i32 dim 1 : vector<4x384xf32>, i32 -> vector<4x384xf32>
    %c56 = arith.constant 56 : index
    %c0_25 = arith.constant 0 : index
    %43 = vector.load %arg5[%c56, %c0_25] : memref<72x384xf32, #tpu.memory_space<vmem>>, vector<4x384xf32>
    tpu.vector_store %arg5[%c56, %c0_25], %42 {strides = array<i32>} : memref<72x384xf32, #tpu.memory_space<vmem>>, vector<4x384xf32>,
    %c346_i32 = arith.constant 346 : i32
    %44 = tpu.dynamic_rotate %27 by %c346_i32 dim 1 : vector<4x384xf32>, i32 -> vector<4x384xf32>
    %c64 = arith.constant 64 : index
    %c0_26 = arith.constant 0 : index
    %45 = vector.load %arg5[%c64, %c0_26] : memref<72x384xf32, #tpu.memory_space<vmem>>, vector<4x384xf32>
    tpu.vector_store %arg5[%c64, %c0_26], %44 {strides = array<i32>} : memref<72x384xf32, #tpu.memory_space<vmem>>, vector<4x384xf32>,
    %c0_27 = arith.constant 0 : index
    %c0_28 = arith.constant 0 : index
    %46 = vector.load %arg2[%c0_27, %c0_28] : memref<4x72xf32, #tpu.memory_space<vmem>>, vector<4x72xf32>
    %c0_29 = arith.constant 0 : index
    %c0_30 = arith.constant 0 : index
    %47 = vector.load %arg5[%c0_29, %c0_30] : memref<72x384xf32, #tpu.memory_space<vmem>>, vector<72x384xf32>
    %cst_31 = arith.constant dense<0.000000e+00> : vector<4x384xf32>
    %48 = tpu.matmul %46, %47, %cst_31 {dimension_numbers = #tpu.dot_dimension_numbers<[1], [0], [0], [1], [0, 0, 1, 1], [], []>} : vector<4x72xf32>, vector<72x384xf32>, vector<4x384xf32> -> vector<4x384xf32>
    %49 = vector.broadcast %15 : vector<1x384xf32> to vector<4x384xf32>
    %50 = arith.mulf %48, %49 : vector<4x384xf32>
    %cst_32 = arith.constant dense<0.000000e+00> : vector<4xf32>
    %51 = vector.multi_reduction <add>, %50, %cst_32 [1] : vector<4x384xf32> to vector<4xf32>
    %52 = vector.shape_cast %51 : vector<4xf32> to vector<4x1xf32>
    %53 = arith.mulf %50, %48 : vector<4x384xf32>
    %cst_33 = arith.constant dense<0.000000e+00> : vector<4xf32>
    %54 = vector.multi_reduction <add>, %53, %cst_33 [1] : vector<4x384xf32> to vector<4xf32>
    %55 = vector.shape_cast %54 : vector<4xf32> to vector<4x1xf32>
    %cst_34 = arith.constant 3.906250e-03 : f32
    %56 = vector.broadcast %cst_34 : f32 to vector<4x1xf32>
    %57 = arith.mulf %52, %56 : vector<4x1xf32>
    %cst_35 = arith.constant 3.906250e-03 : f32
    %58 = vector.broadcast %cst_35 : f32 to vector<4x1xf32>
    %59 = arith.mulf %55, %58 : vector<4x1xf32>
    %60 = arith.mulf %57, %57 : vector<4x1xf32>
    %61 = arith.subf %59, %60 : vector<4x1xf32>
    %cst_36 = arith.constant 0.000000e+00 : f32
    %62 = vector.broadcast %cst_36 : f32 to vector<4x1xf32>
    %63 = arith.maximumf %61, %62 : vector<4x1xf32>
    %64 = vector.broadcast %57 : vector<4x1xf32> to vector<4x384xf32>
    %65 = arith.subf %48, %64 : vector<4x384xf32>
    %cst_37 = arith.constant 9.99999974E-6 : f32
    %66 = vector.broadcast %cst_37 : f32 to vector<4x1xf32>
    %67 = arith.addf %63, %66 : vector<4x1xf32>
    %68 = math.rsqrt %67 : vector<4x1xf32>
    %69 = vector.broadcast %68 : vector<4x1xf32> to vector<4x384xf32>
    %70 = arith.mulf %65, %69 : vector<4x384xf32>
    %c19_i32 = arith.constant 19 : i32
    %71 = tpu.dynamic_rotate %70 by %c19_i32 dim 1 : vector<4x384xf32>, i32 -> vector<4x384xf32>
    %cst_38 = arith.constant 0.000000e+00 : f32
    %72 = vector.broadcast %cst_38 : f32 to vector<1x384xf32>
    %73 = arith.cmpf oeq, %7, %72 : vector<1x384xf32>
    %c382_i32_39 = arith.constant 382 : i32
    %74 = tpu.dynamic_rotate %71 by %c382_i32_39 dim 1 : vector<4x384xf32>, i32 -> vector<4x384xf32>
    %cst_40 = arith.constant 1.700000e+01 : f32
    %75 = vector.broadcast %cst_40 : f32 to vector<1x384xf32>
    %76 = arith.cmpf oeq, %7, %75 : vector<1x384xf32>
    %c2_i32 = arith.constant 2 : i32
    %77 = tpu.dynamic_rotate %71 by %c2_i32 dim 1 : vector<4x384xf32>, i32 -> vector<4x384xf32>
    %78 = vector.shape_cast %76 : vector<1x384xi1> to vector<1x384xi1>
    %79 = vector.broadcast %78 : vector<1x384xi1> to vector<4x384xi1>
    %80 = arith.select %79, %77, %71 : vector<4x384xi1>, vector<4x384xf32>
    %81 = vector.shape_cast %73 : vector<1x384xi1> to vector<1x384xi1>
    %82 = vector.broadcast %81 : vector<1x384xi1> to vector<4x384xi1>
    %83 = arith.select %82, %74, %80 : vector<4x384xi1>, vector<4x384xf32>
    %cst_41 = arith.constant 0.000000e+00 : f32
    %84 = vector.broadcast %cst_41 : f32 to vector<1x384xf32>
    %85 = arith.cmpf oeq, %4, %84 : vector<1x384xf32>
    %c348_i32_42 = arith.constant 348 : i32
    %86 = tpu.dynamic_rotate %83 by %c348_i32_42 dim 1 : vector<4x384xf32>, i32 -> vector<4x384xf32>
    %cst_43 = arith.constant 1.700000e+01 : f32
    %87 = vector.broadcast %cst_43 : f32 to vector<1x384xf32>
    %88 = arith.cmpf oeq, %4, %87 : vector<1x384xf32>
    %c36_i32 = arith.constant 36 : i32
    %89 = tpu.dynamic_rotate %83 by %c36_i32 dim 1 : vector<4x384xf32>, i32 -> vector<4x384xf32>
    %90 = vector.shape_cast %88 : vector<1x384xi1> to vector<1x384xi1>
    %91 = vector.broadcast %90 : vector<1x384xi1> to vector<4x384xi1>
    %92 = arith.select %91, %89, %83 : vector<4x384xi1>, vector<4x384xf32>
    %93 = vector.shape_cast %85 : vector<1x384xi1> to vector<1x384xi1>
    %94 = vector.broadcast %93 : vector<1x384xi1> to vector<4x384xi1>
    %95 = arith.select %94, %86, %92 : vector<4x384xi1>, vector<4x384xf32>
    %c0_i32_44 = arith.constant 0 : i32
    %96 = tpu.dynamic_rotate %95 by %c0_i32_44 dim 1 : vector<4x384xf32>, i32 -> vector<4x384xf32>
    %c0_45 = arith.constant 0 : index
    %c0_46 = arith.constant 0 : index
    %97 = vector.load %arg5[%c0_45, %c0_46] : memref<72x384xf32, #tpu.memory_space<vmem>>, vector<4x384xf32>
    tpu.vector_store %arg5[%c0_45, %c0_46], %96 {strides = array<i32>} : memref<72x384xf32, #tpu.memory_space<vmem>>, vector<4x384xf32>,
    %c383_i32_47 = arith.constant 383 : i32
    %98 = tpu.dynamic_rotate %95 by %c383_i32_47 dim 1 : vector<4x384xf32>, i32 -> vector<4x384xf32>
    %c8_48 = arith.constant 8 : index
    %c0_49 = arith.constant 0 : index
    %99 = vector.load %arg5[%c8_48, %c0_49] : memref<72x384xf32, #tpu.memory_space<vmem>>, vector<4x384xf32>
    tpu.vector_store %arg5[%c8_48, %c0_49], %98 {strides = array<i32>} : memref<72x384xf32, #tpu.memory_space<vmem>>, vector<4x384xf32>,
    %c382_i32_50 = arith.constant 382 : i32
    %100 = tpu.dynamic_rotate %95 by %c382_i32_50 dim 1 : vector<4x384xf32>, i32 -> vector<4x384xf32>
    %c16_51 = arith.constant 16 : index
    %c0_52 = arith.constant 0 : index
    %101 = vector.load %arg5[%c16_51, %c0_52] : memref<72x384xf32, #tpu.memory_space<vmem>>, vector<4x384xf32>
    tpu.vector_store %arg5[%c16_51, %c0_52], %100 {strides = array<i32>} : memref<72x384xf32, #tpu.memory_space<vmem>>, vector<4x384xf32>,
    %c366_i32_53 = arith.constant 366 : i32
    %102 = tpu.dynamic_rotate %95 by %c366_i32_53 dim 1 : vector<4x384xf32>, i32 -> vector<4x384xf32>
    %c24_54 = arith.constant 24 : index
    %c0_55 = arith.constant 0 : index
    %103 = vector.load %arg5[%c24_54, %c0_55] : memref<72x384xf32, #tpu.memory_space<vmem>>, vector<4x384xf32>
    tpu.vector_store %arg5[%c24_54, %c0_55], %102 {strides = array<i32>} : memref<72x384xf32, #tpu.memory_space<vmem>>, vector<4x384xf32>,
    %c365_i32_56 = arith.constant 365 : i32
    %104 = tpu.dynamic_rotate %95 by %c365_i32_56 dim 1 : vector<4x384xf32>, i32 -> vector<4x384xf32>
    %c32_57 = arith.constant 32 : index
    %c0_58 = arith.constant 0 : index
    %105 = vector.load %arg5[%c32_57, %c0_58] : memref<72x384xf32, #tpu.memory_space<vmem>>, vector<4x384xf32>
    tpu.vector_store %arg5[%c32_57, %c0_58], %104 {strides = array<i32>} : memref<72x384xf32, #tpu.memory_space<vmem>>, vector<4x384xf32>,
    %c364_i32_59 = arith.constant 364 : i32
    %106 = tpu.dynamic_rotate %95 by %c364_i32_59 dim 1 : vector<4x384xf32>, i32 -> vector<4x384xf32>
    %c40_60 = arith.constant 40 : index
    %c0_61 = arith.constant 0 : index
    %107 = vector.load %arg5[%c40_60, %c0_61] : memref<72x384xf32, #tpu.memory_space<vmem>>, vector<4x384xf32>
    tpu.vector_store %arg5[%c40_60, %c0_61], %106 {strides = array<i32>} : memref<72x384xf32, #tpu.memory_space<vmem>>, vector<4x384xf32>,
    %c348_i32_62 = arith.constant 348 : i32
    %108 = tpu.dynamic_rotate %95 by %c348_i32_62 dim 1 : vector<4x384xf32>, i32 -> vector<4x384xf32>
    %c48_63 = arith.constant 48 : index
    %c0_64 = arith.constant 0 : index
    %109 = vector.load %arg5[%c48_63, %c0_64] : memref<72x384xf32, #tpu.memory_space<vmem>>, vector<4x384xf32>
    tpu.vector_store %arg5[%c48_63, %c0_64], %108 {strides = array<i32>} : memref<72x384xf32, #tpu.memory_space<vmem>>, vector<4x384xf32>,
    %c347_i32_65 = arith.constant 347 : i32
    %110 = tpu.dynamic_rotate %95 by %c347_i32_65 dim 1 : vector<4x384xf32>, i32 -> vector<4x384xf32>
    %c56_66 = arith.constant 56 : index
    %c0_67 = arith.constant 0 : index
    %111 = vector.load %arg5[%c56_66, %c0_67] : memref<72x384xf32, #tpu.memory_space<vmem>>, vector<4x384xf32>
    tpu.vector_store %arg5[%c56_66, %c0_67], %110 {strides = array<i32>} : memref<72x384xf32, #tpu.memory_space<vmem>>, vector<4x384xf32>,
    %c346_i32_68 = arith.constant 346 : i32
    %112 = tpu.dynamic_rotate %95 by %c346_i32_68 dim 1 : vector<4x384xf32>, i32 -> vector<4x384xf32>
    %c64_69 = arith.constant 64 : index
    %c0_70 = arith.constant 0 : index
    %113 = vector.load %arg5[%c64_69, %c0_70] : memref<72x384xf32, #tpu.memory_space<vmem>>, vector<4x384xf32>
    tpu.vector_store %arg5[%c64_69, %c0_70], %112 {strides = array<i32>} : memref<72x384xf32, #tpu.memory_space<vmem>>, vector<4x384xf32>,
    %c0_71 = arith.constant 0 : index
    %c0_72 = arith.constant 0 : index
    %114 = vector.load %arg3[%c0_71, %c0_72] : memref<4x72xf32, #tpu.memory_space<vmem>>, vector<4x72xf32>
    %c0_73 = arith.constant 0 : index
    %c0_74 = arith.constant 0 : index
    %115 = vector.load %arg5[%c0_73, %c0_74] : memref<72x384xf32, #tpu.memory_space<vmem>>, vector<72x384xf32>
    %cst_75 = arith.constant dense<0.000000e+00> : vector<4x384xf32>
    %116 = tpu.matmul %114, %115, %cst_75 {dimension_numbers = #tpu.dot_dimension_numbers<[1], [0], [0], [1], [0, 0, 1, 1], [], []>} : vector<4x72xf32>, vector<72x384xf32>, vector<4x384xf32> -> vector<4x384xf32>
    %117 = vector.broadcast %15 : vector<1x384xf32> to vector<4x384xf32>
    %118 = arith.mulf %116, %117 : vector<4x384xf32>
    %cst_76 = arith.constant dense<0.000000e+00> : vector<4xf32>
    %119 = vector.multi_reduction <add>, %118, %cst_76 [1] : vector<4x384xf32> to vector<4xf32>
    %120 = vector.shape_cast %119 : vector<4xf32> to vector<4x1xf32>
    %121 = arith.mulf %118, %116 : vector<4x384xf32>
    %cst_77 = arith.constant dense<0.000000e+00> : vector<4xf32>
    %122 = vector.multi_reduction <add>, %121, %cst_77 [1] : vector<4x384xf32> to vector<4xf32>
    %123 = vector.shape_cast %122 : vector<4xf32> to vector<4x1xf32>
    %cst_78 = arith.constant 3.906250e-03 : f32
    %124 = vector.broadcast %cst_78 : f32 to vector<4x1xf32>
    %125 = arith.mulf %120, %124 : vector<4x1xf32>
    %cst_79 = arith.constant 3.906250e-03 : f32
    %126 = vector.broadcast %cst_79 : f32 to vector<4x1xf32>
    %127 = arith.mulf %123, %126 : vector<4x1xf32>
    %128 = arith.mulf %125, %125 : vector<4x1xf32>
    %129 = arith.subf %127, %128 : vector<4x1xf32>
    %cst_80 = arith.constant 0.000000e+00 : f32
    %130 = vector.broadcast %cst_80 : f32 to vector<4x1xf32>
    %131 = arith.maximumf %129, %130 : vector<4x1xf32>
    %132 = vector.broadcast %125 : vector<4x1xf32> to vector<4x384xf32>
    %133 = arith.subf %116, %132 : vector<4x384xf32>
    %cst_81 = arith.constant 9.99999974E-6 : f32
    %134 = vector.broadcast %cst_81 : f32 to vector<4x1xf32>
    %135 = arith.addf %131, %134 : vector<4x1xf32>
    %136 = math.rsqrt %135 : vector<4x1xf32>
    %137 = vector.broadcast %136 : vector<4x1xf32> to vector<4x384xf32>
    %138 = arith.mulf %133, %137 : vector<4x384xf32>
    %c0_82 = arith.constant 0 : index
    %c0_83 = arith.constant 0 : index
    %c0_84 = arith.constant 0 : index
    %139 = vector.load %arg4[%c0_82, %c0_83, %c0_84] : memref<1x4x384xf32, #tpu.memory_space<vmem>>, vector<1x4x384xf32>
    %140 = vector.shape_cast %139 : vector<1x4x384xf32> to vector<4x384xf32>
    %141 = vector.shape_cast %138 : vector<4x384xf32> to vector<1x4x384xf32>
    tpu.vector_store %arg4[%c0_82, %c0_83, %c0_84], %141 {strides = array<i32>} : memref<1x4x384xf32, #tpu.memory_space<vmem>>, vector<1x4x384xf32>,
    return
  }
  func.func @transform_0(%arg0: i32) -> (i32, i32, i32) {
    %c0_i32 = arith.constant 0 : i32
    %c0_i32_0 = arith.constant 0 : i32
    %c0_i32_1 = arith.constant 0 : i32
    return %arg0, %c0_i32, %c0_i32_0 : i32, i32, i32
  }
  func.func @transform_1(%arg0: i32) -> (i32, i32) {
    %c0_i32 = arith.constant 0 : i32
    %c0_i32_0 = arith.constant 0 : i32
    %c0_i32_1 = arith.constant 0 : i32
    return %c0_i32, %c0_i32_0 : i32, i32
  }
  func.func @transform_2(%arg0: i32) -> (i32, i32) {
    %c0_i32 = arith.constant 0 : i32
    %c0_i32_0 = arith.constant 0 : i32
    %c0_i32_1 = arith.constant 0 : i32
    return %c0_i32, %c0_i32_0 : i32, i32
  }
  func.func @transform_3(%arg0: i32) -> (i32, i32, i32) {
    %c0_i32 = arith.constant 0 : i32
    %c0_i32_0 = arith.constant 0 : i32
    %c0_i32_1 = arith.constant 0 : i32
    return %arg0, %c0_i32, %c0_i32_0 : i32, i32, i32
  }
}

</mosaic_0001>

<llo_original>
// kernel: resnet_block_forward.1
$region0: #{resnet_block_forward.1}
  #allocation0 [shape = 'u32[]', space=smem, size = 0x4, offset = 0x4, fixed_abs, tag = 'smem constant byte address 0x4 - core index']
  #allocation1 [shape = 'u32[144,128]{1,0:T(1,128)}', space=vmem, size = 0x12000, scoped, tag = 'internal scratch']
  #allocation2 [shape = 'f32[72,384]{1,0:T(8,128)}', space=vmem, size = 0x1b000, scoped, tag = 'scratch operand']
  %s0 = inlined_call_operand.vmem [shape: f32[2,4,384], index: 0, kind: input, shape index: {}]
  %s1 = inlined_call_operand.vmem [shape: f32[4,72], index: 1, kind: input, shape index: {}]
  %s2 = inlined_call_operand.vmem [shape: f32[4,72], index: 2, kind: input, shape index: {}]
  %s3 = inlined_call_operand.vmem [shape: f32[2,4,384], index: 3, kind: output, shape index: {}]
  %s4 = sld [smem:[#allocation0]]
  $region45: #{resnet_block_forward.1} parent=0
    _
  %s6 = ssub.s32 1, %s4
  %s7 = scalar_select 0, %s6, %s4
  loop: start=0, step=1, limit=4
  $region2: #{resnet_block_forward.1} parent=0 // loop_pre_header
    _
  $region3: #{resnet_block_forward.1} parent=0 // loop_header
    %s9 = sphi 0, %s13
    %p10 = scmp.ge.s32.totalorder %s9, 4
    %s19 = sphi 0, %s21
    %s22 = sphi 0, %s19
    %s23 = sphi 0, %s22
    %s39 = sphi 0, %s23
    %s43 = sphi 0, %s43
    %s45 = sphi 0, %s43
    %s46 = sphi 0, %s45
    %s60 = sphi 0, %s46
    %s64 = sphi 0, %s64
    %s66 = sphi 0, %s64
    %s67 = sphi 0, %s66
    %s81 = sphi 0, %s67
    %s87 = sphi 0, %s89
    %s90 = sphi 0, %s87
    %s91 = sphi 0, %s90
    %s107 = sphi 0, %s91
  $region4: #{resnet_block_forward.1} parent=0 // loop_header_branch
    %12 = sbr.rel (%p10) target = $region8
  $region5: #{resnet_block_forward.1} parent=0 // loop_body
    %s14 = ssub.s32 %s9, 1
    %s15 = ssub.s32 %s9, 2
    %s16 = sadd.s32 %s9, 1
    %s17 = ssub.s32 %s9, %s16
    %p18 = scmp.eq.s32.totalorder %s17, 0
    %s20 = sadd.s32 %s19, 1
    %s21 = scalar_select %p18, %s19, %s20
    %p24 = pneg %p18
    %p25 = scmp.eq.s32.totalorder %s9, 1
    %p26 = por %p24, %p25
    %p27 = scmp.ne.s32.totalorder %s19, %s22
    %p28 = scmp.eq.s32.totalorder %s9, 0
    %p29 = por %p27, %p28
    %p30 = scmp.ne.s32.totalorder %s19, %s22
    %p31 = scmp.eq.s32.totalorder %s14, 1
    %p32 = por %p30, %p31
    %p33 = scmp.ne.s32.totalorder %s22, %s23
    %p34 = scmp.eq.s32.totalorder %s14, 0
    %p35 = por %p33, %p34
    %p36 = scmp.ne.s32.totalorder %s22, %s23
    %p37 = scmp.eq.s32.totalorder %s15, 1
    %p38 = por %p36, %p37
    %p40 = scmp.ne.s32.totalorder %s23, %s39
    %p41 = scmp.eq.s32.totalorder %s15, 0
    %p42 = por %p40, %p41
    %s44 = sadd.s32 %s43, 1
    %p47 = scmp.eq.s32.totalorder %s9, 1
    %p48 = scmp.ne.s32.totalorder %s43, %s45
    %p49 = scmp.eq.s32.totalorder %s9, 0
    %p50 = por %p48, %p49
    %p51 = scmp.ne.s32.totalorder %s43, %s45
    %p52 = scmp.eq.s32.totalorder %s14, 1
    %p53 = por %p51, %p52
    %p54 = scmp.ne.s32.totalorder %s45, %s46
    %p55 = scmp.eq.s32.totalorder %s14, 0
    %p56 = por %p54, %p55
    %p57 = scmp.ne.s32.totalorder %s45, %s46
    %p58 = scmp.eq.s32.totalorder %s15, 1
    %p59 = por %p57, %p58
    %p61 = scmp.ne.s32.totalorder %s46, %s60
    %p62 = scmp.eq.s32.totalorder %s15, 0
    %p63 = por %p61, %p62
    %s65 = sadd.s32 %s64, 1
    %p68 = scmp.eq.s32.totalorder %s9, 1
    %p69 = scmp.ne.s32.totalorder %s64, %s66
    %p70 = scmp.eq.s32.totalorder %s9, 0
    %p71 = por %p69, %p70
    %p72 = scmp.ne.s32.totalorder %s64, %s66
    %p73 = scmp.eq.s32.totalorder %s14, 1
    %p74 = por %p72, %p73
    %p75 = scmp.ne.s32.totalorder %s66, %s67
    %p76 = scmp.eq.s32.totalorder %s14, 0
    %p77 = por %p75, %p76
    %p78 = scmp.ne.s32.totalorder %s66, %s67
    %p79 = scmp.eq.s32.totalorder %s15, 1
    %p80 = por %p78, %p79
    %p82 = scmp.ne.s32.totalorder %s67, %s81
    %p83 = scmp.eq.s32.totalorder %s15, 0
    %p84 = por %p82, %p83
    %s85 = ssub.s32 %s9, %s16
    %p86 = scmp.eq.s32.totalorder %s85, 0
    %s88 = sadd.s32 %s87, 1
    %s89 = scalar_select %p86, %s87, %s88
    %p92 = pneg %p86
    %p93 = scmp.eq.s32.totalorder %s9, 1
    %p94 = por %p92, %p93
    %p95 = scmp.ne.s32.totalorder %s87, %s90
    %p96 = scmp.eq.s32.totalorder %s9, 0
    %p97 = por %p95, %p96
    %p98 = scmp.ne.s32.totalorder %s87, %s90
    %p99 = scmp.eq.s32.totalorder %s14, 1
    %p100 = por %p98, %p99
    %p101 = scmp.ne.s32.totalorder %s90, %s91
    %p102 = scmp.eq.s32.totalorder %s14, 0
    %p103 = por %p101, %p102
    %p104 = scmp.ne.s32.totalorder %s90, %s91
    %p105 = scmp.eq.s32.totalorder %s15, 1
    %p106 = por %p104, %p105
    %p108 = scmp.ne.s32.totalorder %s91, %s107
    %p109 = scmp.eq.s32.totalorder %s15, 0
    %p110 = por %p108, %p109
    %p111 = scmp.le.s32.totalorder 1, %s9
    %p112 = scmp.lt.s32.totalorder %s9, 3
    %p113 = pnand %p111, %p112
    %p114 = pneg %p113
    // Predicated region
    $region9: #{resnet_block_forward.1} parent=5 // pred_check
      _
    $region10: #{resnet_block_forward.1} parent=5 // pred_check_branch
      %116 = sbr.rel (%p113) target = $region12
    $region11: #{resnet_block_forward.1} parent=5 // pred_region
      %s117 = ssub.s32 %s9, 1
      // Predicated region
      $region13: #{resnet_block_forward.1} parent=11 // pred_check
        %p118 = pneg %p56
      $region14: #{resnet_block_forward.1} parent=11 // pred_check_branch
        %120 = sbr.rel (%p118) target = $region16
      $region15: #{resnet_block_forward.1} parent=11 // pred_region
        _
      $region16: #{resnet_block_forward.1} parent=11 // pred_fallthru
        _
      // Predicated region
      $region17: #{resnet_block_forward.1} parent=11 // pred_check
        %p121 = pneg %p77
      $region18: #{resnet_block_forward.1} parent=11 // pred_check_branch
        %123 = sbr.rel (%p121) target = $region20
      $region19: #{resnet_block_forward.1} parent=11 // pred_region
        _
      $region20: #{resnet_block_forward.1} parent=11 // pred_fallthru
        _
    $region12: #{resnet_block_forward.1} parent=5 // pred_fallthru
      _
    %p124 = scmp.lt.s32.totalorder %s9, 2
    // Predicated region
    $region21: #{resnet_block_forward.1} parent=5 // pred_check
      %p125 = pneg %p124
    $region22: #{resnet_block_forward.1} parent=5 // pred_check_branch
      %127 = sbr.rel (%p125) target = $region24
    $region23: #{resnet_block_forward.1} parent=5 // pred_region
      // Predicated region
      $region25: #{resnet_block_forward.1} parent=23 // pred_check
        %p128 = pneg %p29
      $region26: #{resnet_block_forward.1} parent=23 // pred_check_branch
        %130 = sbr.rel (%p128) target = $region28
      $region27: #{resnet_block_forward.1} parent=23 // pred_region
        %p131 = scmp.lt.s32.totalorder %s9, 1
        %s132 = scalar_select %p131, %s9, 1
        %s133 = smul.addr %s132, 3
        %s134 = smul.addr %s133, 4
        %s135 = scalar_lea.vmem %s0, %s134
      $region28: #{resnet_block_forward.1} parent=23 // pred_fallthru
        _
    $region24: #{resnet_block_forward.1} parent=5 // pred_fallthru
      _
    %p136 = scmp.le.s32.totalorder 1, %s9
    %p137 = scmp.lt.s32.totalorder %s9, 3
    %p138 = pnand %p136, %p137
    %p139 = pneg %p138
    // Predicated region
    $region29: #{resnet_block_forward.1} parent=5 // pred_check
      _
    $region30: #{resnet_block_forward.1} parent=5 // pred_check_branch
      %141 = sbr.rel (%p138) target = $region32
    $region31: #{resnet_block_forward.1} parent=5 // pred_region
      %s142 = ssub.s32 %s9, 1
      %p143 = scmp.lt.s32.totalorder %s14, 1
      %s144 = scalar_select %p143, %s14, 1
      %s145 = smul.addr %s144, 3
      %s146 = smul.addr %s145, 4
      %s147 = scalar_lea.vmem %s0, %s146
      %p148 = pneg %p35
      %p149 = pneg %p32
      %p150 = pneg %p56
      %p151 = pneg %p53
      %p152 = pneg %p77
      %p153 = pneg %p74
      %p154 = pneg %p103
      %p155 = pneg %p100
      %p156 = scmp.lt.s32.totalorder %s14, 1
      %s157 = scalar_select %p156, %s14, 1
      %s158 = smul.addr %s157, 3
      %s159 = smul.addr %s158, 4
      %s160 = scalar_lea.vmem %s3, %s159
      %p161 = scmp.lt.s32.totalorder %s14, 1
      %s162 = scalar_select %p161, %s14, 1
      %s163 = smul.addr %s162, 3
      %s164 = smul.addr %s163, 4
      %s165 = scalar_lea.vmem %s0, %s164
      %p166 = scmp.lt.s32.totalorder %s14, 1
      %s167 = scalar_select %p166, %s14, 1
      %s168 = smul.addr %s167, 3
      %s169 = smul.addr %s168, 4
      %s170 = scalar_lea.vmem %s3, %s169
      %v171 = vlaneseq
      %v172 = vand.u32 %v171, 127
      %v173 = vadd.s32 %v172, 128
      %v174 = vadd.s32 %v172, 256
      %v175 = vcvt.s32.f32 %v172
      %v176 = vcvt.s32.f32 %v173
      %v177 = vcvt.s32.f32 %v174
      %v178 = vrcp.pop 18.0
      %v179 = vmul.f32 %v175, %v178
      %v180 = vmul.f32 %v176, %v178
      %v181 = vmul.f32 %v177, %v178
      %v182 = vfloor.f32 %v179
      %v183 = vfloor.f32 %v180
      %v184 = vfloor.f32 %v181
      %v185 = vmul.f32 %v182, 18.0
      %v186 = vmul.f32 %v183, 18.0
      %v187 = vmul.f32 %v184, 18.0
      %v188 = vsub.f32 %v175, %v185
      %v189 = vsub.f32 %v176, %v186
      %v190 = vsub.f32 %v177, %v187
      %vm191 = vcmp.lt.f32.partialorder %v188, 16.0
      %vm192 = vcmp.lt.f32.partialorder %v189, 16.0
      %vm193 = vcmp.lt.f32.partialorder %v190, 16.0
      %vm194 = vcmp.lt.f32.partialorder %v182, 16.0
      %vm195 = vcmp.lt.f32.partialorder %v183, 16.0
      %vm196 = vcmp.lt.f32.partialorder %v184, 16.0
      %vm197 = vmand %vm191, %vm194
      %vm198 = vmand %vm192, %vm195
      %vm199 = vmand %vm193, %vm196
      %v200 = vsel %vm197, 1.0, 0.0
      %v201 = vsel %vm198, 1.0, 0.0
      %v202 = vsel %vm199, 1.0, 0.0
      %203 = vst [vmem:[#allocation2] sm:$0xf0] 0.0
      %204 = vst [vmem:[#allocation2 + $0x8] sm:$0xf0] 0.0
      %205 = vst [vmem:[#allocation2 + $0x10] sm:$0xf0] 0.0
      %206 = vst [vmem:[#allocation2 + $0x18] sm:$0xf0] 0.0
      %207 = vst [vmem:[#allocation2 + $0x20] sm:$0xf0] 0.0
      %208 = vst [vmem:[#allocation2 + $0x28] sm:$0xf0] 0.0
      %209 = vst [vmem:[#allocation2 + $0x30] sm:$0xf0] 0.0
      %210 = vst [vmem:[#allocation2 + $0x38] sm:$0xf0] 0.0
      %211 = vst [vmem:[#allocation2 + $0x40] sm:$0xf0] 0.0
      %212 = vst [vmem:[#allocation2 + $0x48] sm:$0xf0] 0.0
      %213 = vst [vmem:[#allocation2 + $0x50] sm:$0xf0] 0.0
      %214 = vst [vmem:[#allocation2 + $0x58] sm:$0xf0] 0.0
      %215 = vst [vmem:[#allocation2 + $0x60] sm:$0xf0] 0.0
      %216 = vst [vmem:[#allocation2 + $0x68] sm:$0xf0] 0.0
      %217 = vst [vmem:[#allocation2 + $0x70] sm:$0xf0] 0.0
      %218 = vst [vmem:[#allocation2 + $0x78] sm:$0xf0] 0.0
      %219 = vst [vmem:[#allocation2 + $0x80] sm:$0xf0] 0.0
      %220 = vst [vmem:[#allocation2 + $0x88] sm:$0xf0] 0.0
      %221 = vst [vmem:[#allocation2 + $0x90] sm:$0xf0] 0.0
      %222 = vst [vmem:[#allocation2 + $0x98] sm:$0xf0] 0.0
      %223 = vst [vmem:[#allocation2 + $0xa0] sm:$0xf0] 0.0
      %224 = vst [vmem:[#allocation2 + $0xa8] sm:$0xf0] 0.0
      %225 = vst [vmem:[#allocation2 + $0xb0] sm:$0xf0] 0.0
      %226 = vst [vmem:[#allocation2 + $0xb8] sm:$0xf0] 0.0
      %227 = vst [vmem:[#allocation2 + $0xc0] sm:$0xf0] 0.0
      %228 = vst [vmem:[#allocation2 + $0xc8] sm:$0xf0] 0.0
      %229 = vst [vmem:[#allocation2 + $0xd0] sm:$0xf0] 0.0
      %v230 = vld [vmem:[%s165] sm:$0xff]
      %v231 = vld [vmem:[%s165 + $0x8] sm:$0xf]
      %v233 = vcombine.high %v230, %v230
      %235 = vst [vmem:[#allocation2] sm:$0xf] %v230
      %236 = vst [vmem:[#allocation2 + $0x8] sm:$0xf] %v233
      %237 = vst [vmem:[#allocation2 + $0x10] sm:$0xf] %v231
      %238 = vrot.lane.b32.xlu0 %v230, 127
      %v239 = vpop.permute.xlu0 %238
      %240 = vrot.lane.b32.xlu0 %v233, 127
      %v241 = vpop.permute.xlu0 %240
      %242 = vrot.lane.b32.xlu0 %v231, 127
      %v243 = vpop.permute.xlu0 %242
      %vm244 = vcmp.lt.s32.totalorder %v172, 127
      %v245 = vsel %vm244, %v241, %v243
      %v246 = vsel %vm244, %v239, %v241
      %v247 = vsel %vm244, %v243, %v239
      %248 = vst [vmem:[#allocation2 + $0x18] sm:$0xf] %v246
      %249 = vst [vmem:[#allocation2 + $0x20] sm:$0xf] %v245
      %250 = vst [vmem:[#allocation2 + $0x28] sm:$0xf] %v247
      %251 = vrot.lane.b32.xlu0 %v230, 126
      %v252 = vpop.permute.xlu0 %251
      %253 = vrot.lane.b32.xlu0 %v233, 126
      %v254 = vpop.permute.xlu0 %253
      %255 = vrot.lane.b32.xlu0 %v231, 126
      %v256 = vpop.permute.xlu0 %255
      %vm257 = vcmp.lt.s32.totalorder %v172, 126
      %v258 = vsel %vm257, %v254, %v256
      %v259 = vsel %vm257, %v252, %v254
      %v260 = vsel %vm257, %v256, %v252
      %261 = vst [vmem:[#allocation2 + $0x30] sm:$0xf] %v259
      %262 = vst [vmem:[#allocation2 + $0x38] sm:$0xf] %v258
      %263 = vst [vmem:[#allocation2 + $0x40] sm:$0xf] %v260
      %264 = vrot.lane.b32.xlu0 %v230, 110
      %v265 = vpop.permute.xlu0 %264
      %266 = vrot.lane.b32.xlu0 %v233, 110
      %v267 = vpop.permute.xlu0 %266
      %268 = vrot.lane.b32.xlu0 %v231, 110
      %v269 = vpop.permute.xlu0 %268
      %vm270 = vcmp.lt.s32.totalorder %v172, 110
      %v271 = vsel %vm270, %v267, %v269
      %v272 = vsel %vm270, %v265, %v267
      %v273 = vsel %vm270, %v269, %v265
      %274 = vst [vmem:[#allocation2 + $0x48] sm:$0xf] %v272
      %275 = vst [vmem:[#allocation2 + $0x50] sm:$0xf] %v271
      %276 = vst [vmem:[#allocation2 + $0x58] sm:$0xf] %v273
      %277 = vrot.lane.b32.xlu0 %v230, 109
      %v278 = vpop.permute.xlu0 %277
      %279 = vrot.lane.b32.xlu0 %v233, 109
      %v280 = vpop.permute.xlu0 %279
      %281 = vrot.lane.b32.xlu0 %v231, 109
      %v282 = vpop.permute.xlu0 %281
      %vm283 = vcmp.lt.s32.totalorder %v172, 109
      %v284 = vsel %vm283, %v280, %v282
      %v285 = vsel %vm283, %v278, %v280
      %v286 = vsel %vm283, %v282, %v278
      %287 = vst [vmem:[#allocation2 + $0x60] sm:$0xf] %v285
      %288 = vst [vmem:[#allocation2 + $0x68] sm:$0xf] %v284
      %289 = vst [vmem:[#allocation2 + $0x70] sm:$0xf] %v286
      %290 = vrot.lane.b32.xlu0 %v230, 108
      %v291 = vpop.permute.xlu0 %290
      %292 = vrot.lane.b32.xlu0 %v233, 108
      %v293 = vpop.permute.xlu0 %292
      %294 = vrot.lane.b32.xlu0 %v231, 108
      %v295 = vpop.permute.xlu0 %294
      %vm296 = vcmp.lt.s32.totalorder %v172, 108
      %v297 = vsel %vm296, %v293, %v295
      %v298 = vsel %vm296, %v291, %v293
      %v299 = vsel %vm296, %v295, %v291
      %300 = vst [vmem:[#allocation2 + $0x78] sm:$0xf] %v298
      %301 = vst [vmem:[#allocation2 + $0x80] sm:$0xf] %v297
      %302 = vst [vmem:[#allocation2 + $0x88] sm:$0xf] %v299
      %303 = vrot.lane.b32.xlu0 %v230, 92
      %v304 = vpop.permute.xlu0 %303
      %305 = vrot.lane.b32.xlu0 %v233, 92
      %v306 = vpop.permute.xlu0 %305
      %307 = vrot.lane.b32.xlu0 %v231, 92
      %v308 = vpop.permute.xlu0 %307
      %vm309 = vcmp.lt.s32.totalorder %v172, 92
      %v310 = vsel %vm309, %v306, %v308
      %v311 = vsel %vm309, %v304, %v306
      %v312 = vsel %vm309, %v308, %v304
      %313 = vst [vmem:[#allocation2 + $0x90] sm:$0xf] %v311
      %314 = vst [vmem:[#allocation2 + $0x98] sm:$0xf] %v310
      %315 = vst [vmem:[#allocation2 + $0xa0] sm:$0xf] %v312
      %316 = vrot.lane.b32.xlu0 %v230, 91
      %v317 = vpop.permute.xlu0 %316
      %318 = vrot.lane.b32.xlu0 %v233, 91
      %v319 = vpop.permute.xlu0 %318
      %320 = vrot.lane.b32.xlu0 %v231, 91
      %v321 = vpop.permute.xlu0 %320
      %vm322 = vcmp.lt.s32.totalorder %v172, 91
      %v323 = vsel %vm322, %v319, %v321
      %v324 = vsel %vm322, %v317, %v319
      %v325 = vsel %vm322, %v321, %v317
      %326 = vst [vmem:[#allocation2 + $0xa8] sm:$0xf] %v324
      %327 = vst [vmem:[#allocation2 + $0xb0] sm:$0xf] %v323
      %328 = vst [vmem:[#allocation2 + $0xb8] sm:$0xf] %v325
      %329 = vrot.lane.b32.xlu0 %v230, 90
      %v330 = vpop.permute.xlu0 %329
      %331 = vrot.lane.b32.xlu0 %v233, 90
      %v332 = vpop.permute.xlu0 %331
      %333 = vrot.lane.b32.xlu0 %v231, 90
      %v334 = vpop.permute.xlu0 %333
      %vm335 = vcmp.lt.s32.totalorder %v172, 90
      %v336 = vsel %vm335, %v332, %v334
      %v337 = vsel %vm335, %v330, %v332
      %v338 = vsel %vm335, %v334, %v330
      %339 = vst [vmem:[#allocation2 + $0xc0] sm:$0xf] %v337
      %340 = vst [vmem:[#allocation2 + $0xc8] sm:$0xf] %v336
      %341 = vst [vmem:[#allocation2 + $0xd0] sm:$0xf] %v338
      %v342 = vld [vmem:[%s1] sm:$0xf]
      %v343 = vld [vmem:[#allocation2] sm:$0xff]
      %v344 = vld [vmem:[#allocation2 + $0x8] sm:$0xff]
      %v345 = vld [vmem:[#allocation2 + $0x10] sm:$0xff]
      %v346 = vld [vmem:[#allocation2 + $0x18] sm:$0xff]
      %v347 = vld [vmem:[#allocation2 + $0x20] sm:$0xff]
      %v348 = vld [vmem:[#allocation2 + $0x28] sm:$0xff]
      %v349 = vld [vmem:[#allocation2 + $0x30] sm:$0xff]
      %v350 = vld [vmem:[#allocation2 + $0x38] sm:$0xff]
      %v351 = vld [vmem:[#allocation2 + $0x40] sm:$0xff]
      %v352 = vld [vmem:[#allocation2 + $0x48] sm:$0xff]
      %v353 = vld [vmem:[#allocation2 + $0x50] sm:$0xff]
      %v354 = vld [vmem:[#allocation2 + $0x58] sm:$0xff]
      %v355 = vld [vmem:[#allocation2 + $0x60] sm:$0xff]
      %v356 = vld [vmem:[#allocation2 + $0x68] sm:$0xff]
      %v357 = vld [vmem:[#allocation2 + $0x70] sm:$0xff]
      %v358 = vld [vmem:[#allocation2 + $0x78] sm:$0xff]
      %v359 = vld [vmem:[#allocation2 + $0x80] sm:$0xff]
      %v360 = vld [vmem:[#allocation2 + $0x88] sm:$0xff]
      %v361 = vld [vmem:[#allocation2 + $0x90] sm:$0xff]
      %v362 = vld [vmem:[#allocation2 + $0x98] sm:$0xff]
      %v363 = vld [vmem:[#allocation2 + $0xa0] sm:$0xff]
      %v364 = vld [vmem:[#allocation2 + $0xa8] sm:$0xff]
      %v365 = vld [vmem:[#allocation2 + $0xb0] sm:$0xff]
      %v366 = vld [vmem:[#allocation2 + $0xb8] sm:$0xff]
      %v367 = vld [vmem:[#allocation2 + $0xc0] sm:$0xff]
      %v368 = vld [vmem:[#allocation2 + $0xc8] sm:$0xff]
      %v369 = vld [vmem:[#allocation2 + $0xd0] sm:$0xff]
      %vm370 = vcmask 588800
      %v372 = vsel %vm370, %v342, 0
      %374 = vmatprep.subr.mxu0 %v344
      %375 = vmatpush1.msra.mxu0 %v343
      %376 = vmatprep.subr.mxu0 %v347
      %377 = vmatpush1.msra.mxu0 %v346
      %378 = vmatprep.subr.mxu0 %v350
      %379 = vmatpush1.msra.mxu0 %v349
      %380 = vmatprep.subr.mxu0 %v353
      %381 = vmatpush1.msra.mxu0 %v352
      %382 = vmatprep.subr.mxu0 %v356
      %383 = vmatpush1.msra.mxu0 %v355
      %384 = vmatprep.subr.mxu0 %v359
      %385 = vmatpush1.msra.mxu0 %v358
      %386 = vmatprep.subr.mxu0 %v362
      %387 = vmatpush1.msra.mxu0 %v361
      %388 = vmatprep.subr.mxu0 %v365
      %389 = vmatpush1.msra.mxu0 %v364
      %390 = vmatprep.subr.mxu0 %v368
      %391 = vmatpush1.msra.mxu0 %v367
      %392 = vmatprep.subr.mxu0 0.0
      %393 = vmatpush1.msra.mxu0 0.0
      %394 = vmatprep.subr.mxu0 0.0
      %395 = vmatpush1.msra.mxu0 0.0
      %396 = vmatprep.subr.mxu0 0.0
      %397 = vmatpush1.msra.mxu0 0.0
      %398 = vmatprep.subr.mxu0 0.0
      %399 = vmatpush1.msra.mxu0 0.0
      %400 = vmatprep.subr.mxu0 0.0
      %401 = vmatpush1.msra.mxu0 0.0
      %402 = vmatprep.subr.mxu0 0.0
      %403 = vmatpush1.msra.mxu0 0.0
      %404 = vmatprep.subr.mxu0 0.0
      %405 = vmatpush1.msra.mxu0 0.0
      %406 = vmatprep.subr.mxu0 0.0
      %407 = vmatpush1.msra.mxu0 0.0
      %408 = vmatprep.subr.mxu0 0.0
      %409 = vmatpush1.msra.mxu0 0.0
      %410 = vmatprep.subr.mxu0 0.0
      %411 = vmatpush1.msra.mxu0 0.0
      %412 = vmatprep.subr.mxu0 0.0
      %413 = vmatpush1.msra.mxu0 0.0
      %414 = vmatprep.subr.mxu0 0.0
      %415 = vmatpush1.msra.mxu0 0.0
      %416 = vmatprep.subr.mxu0 0.0
      %417 = vmatpush1.msra.mxu0 0.0
      %418 = vmatprep.subr.mxu0 0.0
      %419 = vmatpush1.msra.mxu0 0.0
      %420 = vmatprep.subr.mxu0 0.0
      %421 = vmatpush1.msra.mxu0 0.0
      %422 = vmatprep.subr.mxu0 0.0
      %423 = vmatpush1.msra.mxu0 0.0
      %424 = vmatprep.subr.mxu0 0.0
      %425 = vmatpush1.msra.mxu0 0.0
      %426 = vmatprep.subr.mxu0 0.0
      %427 = vmatpush1.msra.mxu0 0.0
      %428 = vmatprep.subr.mxu0 0.0
      %429 = vmatpush1.msra.mxu0 0.0
      %430 = vmatprep.subr.mxu0 0.0
      %431 = vmatpush1.msra.mxu0 0.0
      %432 = vmatprep.subr.mxu0 0.0
      %433 = vmatpush1.msra.mxu0 0.0
      %434 = vmatprep.subr.mxu0 0.0
      %435 = vmatpush1.msra.mxu0 0.0
      %436 = vmatprep.subr.mxu0 0.0
      %437 = vmatpush1.msra.mxu0 0.0
      %438 = vmatprep.mubr.f32.mxu0 0.0
      %439 = vmatmul.mubr.f32.gmra.mrb[0].mxu0 %v372
      %v440 = vpop.f32.mrb[0].mxu0
      %v441 = vadd.f32 0.0, %v440
      %v442 = vpop.f32.mrb[0].mxu0
      %v443 = vadd.f32 0.0, %v442
      %444 = vdwg.mxu0
      %445 = vmatprep.subr.mxu0 0.0
      %446 = vmatpush1.msra.mxu0 %v345
      %447 = vmatprep.subr.mxu0 0.0
      %448 = vmatpush1.msra.mxu0 %v348
      %449 = vmatprep.subr.mxu0 0.0
      %450 = vmatpush1.msra.mxu0 %v351
      %451 = vmatprep.subr.mxu0 0.0
      %452 = vmatpush1.msra.mxu0 %v354
      %453 = vmatprep.subr.mxu0 0.0
      %454 = vmatpush1.msra.mxu0 %v357
      %455 = vmatprep.subr.mxu0 0.0
      %456 = vmatpush1.msra.mxu0 %v360
      %457 = vmatprep.subr.mxu0 0.0
      %458 = vmatpush1.msra.mxu0 %v363
      %459 = vmatprep.subr.mxu0 0.0
      %460 = vmatpush1.msra.mxu0 %v366
      %461 = vmatprep.subr.mxu0 0.0
      %462 = vmatpush1.msra.mxu0 %v369
      %463 = vmatprep.subr.mxu0 0.0
      %464 = vmatpush1.msra.mxu0 0.0
      %465 = vmatprep.subr.mxu0 0.0
      %466 = vmatpush1.msra.mxu0 0.0
      %467 = vmatprep.subr.mxu0 0.0
      %468 = vmatpush1.msra.mxu0 0.0
      %469 = vmatprep.subr.mxu0 0.0
      %470 = vmatpush1.msra.mxu0 0.0
      %471 = vmatprep.subr.mxu0 0.0
      %472 = vmatpush1.msra.mxu0 0.0
      %473 = vmatprep.subr.mxu0 0.0
      %474 = vmatpush1.msra.mxu0 0.0
      %475 = vmatprep.subr.mxu0 0.0
      %476 = vmatpush1.msra.mxu0 0.0
      %477 = vmatprep.subr.mxu0 0.0
      %478 = vmatpush1.msra.mxu0 0.0
      %479 = vmatprep.subr.mxu0 0.0
      %480 = vmatpush1.msra.mxu0 0.0
      %481 = vmatprep.subr.mxu0 0.0
      %482 = vmatpush1.msra.mxu0 0.0
      %483 = vmatprep.subr.mxu0 0.0
      %484 = vmatpush1.msra.mxu0 0.0
      %485 = vmatprep.subr.mxu0 0.0
      %486 = vmatpush1.msra.mxu0 0.0
      %487 = vmatprep.subr.mxu0 0.0
      %488 = vmatpush1.msra.mxu0 0.0
      %489 = vmatprep.subr.mxu0 0.0
      %490 = vmatpush1.msra.mxu0 0.0
      %491 = vmatprep.subr.mxu0 0.0
      %492 = vmatpush1.msra.mxu0 0.0
      %493 = vmatprep.subr.mxu0 0.0
      %494 = vmatpush1.msra.mxu0 0.0
      %495 = vmatprep.subr.mxu0 0.0
      %496 = vmatpush1.msra.mxu0 0.0
      %497 = vmatprep.subr.mxu0 0.0
      %498 = vmatpush1.msra.mxu0 0.0
      %499 = vmatprep.subr.mxu0 0.0
      %500 = vmatpush1.msra.mxu0 0.0
      %501 = vmatprep.subr.mxu0 0.0
      %502 = vmatpush1.msra.mxu0 0.0
      %503 = vmatprep.subr.mxu0 0.0
      %504 = vmatpush1.msra.mxu0 0.0
      %505 = vmatprep.subr.mxu0 0.0
      %506 = vmatpush1.msra.mxu0 0.0
      %507 = vmatprep.subr.mxu0 0.0
      %508 = vmatpush1.msra.mxu0 0.0
      %509 = vmatprep.mubr.f32.mxu0 0.0
      %510 = vmatmul.mubr.f32.gmra.mrb[0].mxu0 %v372
      %v511 = vpop.f32.mrb[0].mxu0
      %v512 = vadd.f32 0.0, %v511
      %v513 = vpop.f32.mrb[0].mxu0
      %514 = vdwg.mxu0
      %v515 = vmul.f32 %v441, %v200
      %v516 = vmul.f32 %v443, %v201
      %v517 = vmul.f32 %v512, %v202
      %vm518 = vcmask 1043456
      %v519 = vsel %vm518, %v515, 0.0
      %v520 = vsel %vm518, %v516, 0.0
      %v521 = vadd.f32 %v519, %v520
      %v522 = vsel %vm518, %v517, 0.0
      %v523 = vadd.f32 %v521, %v522
      %524 = vadd.xlane.f32.xlu0 %v523
      %v525 = vpop.xlane.xlu0 %524
      %v526 = vmul.f32 %v515, %v441
      %v527 = vmul.f32 %v516, %v443
      %v528 = vmul.f32 %v517, %v512
      %v529 = vsel %vm518, %v526, 0.0
      %v530 = vsel %vm518, %v527, 0.0
      %v531 = vadd.f32 %v529, %v530
      %v532 = vsel %vm518, %v528, 0.0
      %v533 = vadd.f32 %v531, %v532
      %534 = vadd.xlane.f32.xlu0 %v533
      %v535 = vpop.xlane.xlu0 %534
      %v536 = vmul.f32 %v525, 0.00390625
      %v537 = vmul.f32 %v535, 0.00390625
      %v538 = vmul.f32 %v536, %v536
      %v539 = vsub.f32 %v537, %v538
      %v540 = vmax.f32 %v539, 0.0
      %v541 = vsub.f32 %v441, %v536
      %v542 = vsub.f32 %v443, %v536
      %v543 = vsub.f32 %v512, %v536
      %v544 = vadd.f32 %v540, 1e-05
      %v545 = vrsqrt.pop %v544
      %v546 = vmul.f32 %v541, %v545
      %v547 = vmul.f32 %v542, %v545
      %v548 = vmul.f32 %v543, %v545
      %549 = vrot.lane.b32.xlu0 %v546, 19
      %v550 = vpop.permute.xlu0 %549
      %551 = vrot.lane.b32.xlu0 %v547, 19
      %v552 = vpop.permute.xlu0 %551
      %553 = vrot.lane.b32.xlu0 %v548, 19
      %v554 = vpop.permute.xlu0 %553
      %vm555 = vcmp.lt.s32.totalorder %v172, 19
      %v556 = vsel %vm555, %v552, %v554
      %v557 = vsel %vm555, %v550, %v552
      %v558 = vsel %vm555, %v554, %v550
      %vm559 = vcmp.eq.f32.partialorder %v188, 0.0
      %vm560 = vcmp.eq.f32.partialorder %v189, 0.0
      %vm561 = vcmp.eq.f32.partialorder %v190, 0.0
      %562 = vrot.lane.b32.xlu0 %v558, 126
      %v563 = vpop.permute.xlu0 %562
      %564 = vrot.lane.b32.xlu0 %v557, 126
      %v565 = vpop.permute.xlu0 %564
      %566 = vrot.lane.b32.xlu0 %v556, 126
      %v567 = vpop.permute.xlu0 %566
      %v568 = vsel %vm257, %v565, %v567
      %v569 = vsel %vm257, %v563, %v565
      %v570 = vsel %vm257, %v567, %v563
      %vm571 = vcmp.eq.f32.partialorder %v188, 17.0
      %vm572 = vcmp.eq.f32.partialorder %v189, 17.0
      %vm573 = vcmp.eq.f32.partialorder %v190, 17.0
      %574 = vrot.lane.b32.xlu0 %v558, 2
      %v575 = vpop.permute.xlu0 %574
      %576 = vrot.lane.b32.xlu0 %v557, 2
      %v577 = vpop.permute.xlu0 %576
      %578 = vrot.lane.b32.xlu0 %v556, 2
      %v579 = vpop.permute.xlu0 %578
      %vm580 = vcmp.lt.s32.totalorder %v172, 2
      %v581 = vsel %vm580, %v577, %v579
      %v582 = vsel %vm580, %v575, %v577
      %v583 = vsel %vm580, %v579, %v575
      %v584 = vsel %vm571, 1, 0
      %v585 = vsel %vm572, 1, 0
      %v586 = vsel %vm573, 1, 0
      %vm587 = vcmp.eq.s32.totalorder %v584, 1
      %vm588 = vcmp.eq.s32.totalorder %v585, 1
      %vm589 = vcmp.eq.s32.totalorder %v586, 1
      %v590 = vsel %vm587, %v583, %v558
      %v591 = vsel %vm588, %v582, %v557
      %v592 = vsel %vm589, %v581, %v556
      %v593 = vsel %vm559, 1, 0
      %v594 = vsel %vm560, 1, 0
      %v595 = vsel %vm561, 1, 0
      %vm596 = vcmp.eq.s32.totalorder %v593, 1
      %vm597 = vcmp.eq.s32.totalorder %v594, 1
      %vm598 = vcmp.eq.s32.totalorder %v595, 1
      %v599 = vsel %vm596, %v569, %v590
      %v600 = vsel %vm597, %v568, %v591
      %v601 = vsel %vm598, %v570, %v592
      %vm602 = vcmp.eq.f32.partialorder %v182, 0.0
      %vm603 = vcmp.eq.f32.partialorder %v183, 0.0
      %vm604 = vcmp.eq.f32.partialorder %v184, 0.0
      %605 = vrot.lane.b32.xlu0 %v599, 92
      %v606 = vpop.permute.xlu0 %605
      %607 = vrot.lane.b32.xlu0 %v600, 92
      %v608 = vpop.permute.xlu0 %607
      %609 = vrot.lane.b32.xlu0 %v601, 92
      %v610 = vpop.permute.xlu0 %609
      %v611 = vsel %vm309, %v608, %v610
      %v612 = vsel %vm309, %v606, %v608
      %v613 = vsel %vm309, %v610, %v606
      %vm614 = vcmp.eq.f32.partialorder %v182, 17.0
      %vm615 = vcmp.eq.f32.partialorder %v183, 17.0
      %vm616 = vcmp.eq.f32.partialorder %v184, 17.0
      %617 = vrot.lane.b32.xlu0 %v599, 36
      %v618 = vpop.permute.xlu0 %617
      %619 = vrot.lane.b32.xlu0 %v600, 36
      %v620 = vpop.permute.xlu0 %619
      %621 = vrot.lane.b32.xlu0 %v601, 36
      %v622 = vpop.permute.xlu0 %621
      %vm623 = vcmp.lt.s32.totalorder %v172, 36
      %v624 = vsel %vm623, %v620, %v622
      %v625 = vsel %vm623, %v618, %v620
      %v626 = vsel %vm623, %v622, %v618
      %v627 = vsel %vm614, 1, 0
      %v628 = vsel %vm615, 1, 0
      %v629 = vsel %vm616, 1, 0
      %vm630 = vcmp.eq.s32.totalorder %v627, 1
      %vm631 = vcmp.eq.s32.totalorder %v628, 1
      %vm632 = vcmp.eq.s32.totalorder %v629, 1
      %v633 = vsel %vm630, %v626, %v599
      %v634 = vsel %vm631, %v625, %v600
      %v635 = vsel %vm632, %v624, %v601
      %v636 = vsel %vm602, 1, 0
      %v637 = vsel %vm603, 1, 0
      %v638 = vsel %vm604, 1, 0
      %vm639 = vcmp.eq.s32.totalorder %v636, 1
      %vm640 = vcmp.eq.s32.totalorder %v637, 1
      %vm641 = vcmp.eq.s32.totalorder %v638, 1
      %v642 = vsel %vm639, %v612, %v633
      %v643 = vsel %vm640, %v611, %v634
      %v644 = vsel %vm641, %v613, %v635
      %645 = vst [vmem:[#allocation2] sm:$0xf] %v642
      %646 = vst [vmem:[#allocation2 + $0x8] sm:$0xf] %v643
      %647 = vst [vmem:[#allocation2 + $0x10] sm:$0xf] %v644
      %648 = vrot.lane.b32.xlu0 %v642, 127
      %v649 = vpop.permute.xlu0 %648
      %650 = vrot.lane.b32.xlu0 %v643, 127
      %v651 = vpop.permute.xlu0 %650
      %652 = vrot.lane.b32.xlu0 %v644, 127
      %v653 = vpop.permute.xlu0 %652
      %v654 = vsel %vm244, %v651, %v653
      %v655 = vsel %vm244, %v649, %v651
      %v656 = vsel %vm244, %v653, %v649
      %657 = vst [vmem:[#allocation2 + $0x18] sm:$0xf] %v655
      %658 = vst [vmem:[#allocation2 + $0x20] sm:$0xf] %v654
      %659 = vst [vmem:[#allocation2 + $0x28] sm:$0xf] %v656
      %660 = vrot.lane.b32.xlu0 %v642, 126
      %v661 = vpop.permute.xlu0 %660
      %662 = vrot.lane.b32.xlu0 %v643, 126
      %v663 = vpop.permute.xlu0 %662
      %664 = vrot.lane.b32.xlu0 %v644, 126
      %v665 = vpop.permute.xlu0 %664
      %v666 = vsel %vm257, %v663, %v665
      %v667 = vsel %vm257, %v661, %v663
      %v668 = vsel %vm257, %v665, %v661
      %669 = vst [vmem:[#allocation2 + $0x30] sm:$0xf] %v667
      %670 = vst [vmem:[#allocation2 + $0x38] sm:$0xf] %v666
      %671 = vst [vmem:[#allocation2 + $0x40] sm:$0xf] %v668
      %672 = vrot.lane.b32.xlu0 %v642, 110
      %v673 = vpop.permute.xlu0 %672
      %674 = vrot.lane.b32.xlu0 %v643, 110
      %v675 = vpop.permute.xlu0 %674
      %676 = vrot.lane.b32.xlu0 %v644, 110
      %v677 = vpop.permute.xlu0 %676
      %v678 = vsel %vm270, %v675, %v677
      %v679 = vsel %vm270, %v673, %v675
      %v680 = vsel %vm270, %v677, %v673
      %681 = vst [vmem:[#allocation2 + $0x48] sm:$0xf] %v679
      %682 = vst [vmem:[#allocation2 + $0x50] sm:$0xf] %v678
      %683 = vst [vmem:[#allocation2 + $0x58] sm:$0xf] %v680
      %684 = vrot.lane.b32.xlu0 %v642, 109
      %v685 = vpop.permute.xlu0 %684
      %686 = vrot.lane.b32.xlu0 %v643, 109
      %v687 = vpop.permute.xlu0 %686
      %688 = vrot.lane.b32.xlu0 %v644, 109
      %v689 = vpop.permute.xlu0 %688
      %v690 = vsel %vm283, %v687, %v689
      %v691 = vsel %vm283, %v685, %v687
      %v692 = vsel %vm283, %v689, %v685
      %693 = vst [vmem:[#allocation2 + $0x60] sm:$0xf] %v691
      %694 = vst [vmem:[#allocation2 + $0x68] sm:$0xf] %v690
      %695 = vst [vmem:[#allocation2 + $0x70] sm:$0xf] %v692
      %696 = vrot.lane.b32.xlu0 %v642, 108
      %v697 = vpop.permute.xlu0 %696
      %698 = vrot.lane.b32.xlu0 %v643, 108
      %v699 = vpop.permute.xlu0 %698
      %700 = vrot.lane.b32.xlu0 %v644, 108
      %v701 = vpop.permute.xlu0 %700
      %v702 = vsel %vm296, %v699, %v701
      %v703 = vsel %vm296, %v697, %v699
      %v704 = vsel %vm296, %v701, %v697
      %705 = vst [vmem:[#allocation2 + $0x78] sm:$0xf] %v703
      %706 = vst [vmem:[#allocation2 + $0x80] sm:$0xf] %v702
      %707 = vst [vmem:[#allocation2 + $0x88] sm:$0xf] %v704
      %708 = vrot.lane.b32.xlu0 %v642, 92
      %v709 = vpop.permute.xlu0 %708
      %710 = vrot.lane.b32.xlu0 %v643, 92
      %v711 = vpop.permute.xlu0 %710
      %712 = vrot.lane.b32.xlu0 %v644, 92
      %v713 = vpop.permute.xlu0 %712
      %v714 = vsel %vm309, %v711, %v713
      %v715 = vsel %vm309, %v709, %v711
      %v716 = vsel %vm309, %v713, %v709
      %717 = vst [vmem:[#allocation2 + $0x90] sm:$0xf] %v715
      %718 = vst [vmem:[#allocation2 + $0x98] sm:$0xf] %v714
      %719 = vst [vmem:[#allocation2 + $0xa0] sm:$0xf] %v716
      %720 = vrot.lane.b32.xlu0 %v642, 91
      %v721 = vpop.permute.xlu0 %720
      %722 = vrot.lane.b32.xlu0 %v643, 91
      %v723 = vpop.permute.xlu0 %722
      %724 = vrot.lane.b32.xlu0 %v644, 91
      %v725 = vpop.permute.xlu0 %724
      %v726 = vsel %vm322, %v723, %v725
      %v727 = vsel %vm322, %v721, %v723
      %v728 = vsel %vm322, %v725, %v721
      %729 = vst [vmem:[#allocation2 + $0xa8] sm:$0xf] %v727
      %730 = vst [vmem:[#allocation2 + $0xb0] sm:$0xf] %v726
      %731 = vst [vmem:[#allocation2 + $0xb8] sm:$0xf] %v728
      %732 = vrot.lane.b32.xlu0 %v642, 90
      %v733 = vpop.permute.xlu0 %732
      %734 = vrot.lane.b32.xlu0 %v643, 90
      %v735 = vpop.permute.xlu0 %734
      %736 = vrot.lane.b32.xlu0 %v644, 90
      %v737 = vpop.permute.xlu0 %736
      %v738 = vsel %vm335, %v735, %v737
      %v739 = vsel %vm335, %v733, %v735
      %v740 = vsel %vm335, %v737, %v733
      %741 = vst [vmem:[#allocation2 + $0xc0] sm:$0xf] %v739
      %742 = vst [vmem:[#allocation2 + $0xc8] sm:$0xf] %v738
      %743 = vst [vmem:[#allocation2 + $0xd0] sm:$0xf] %v740
      %v744 = vld [vmem:[%s2] sm:$0xf]
      %v745 = vld [vmem:[#allocation2] sm:$0xff]
      %v746 = vld [vmem:[#allocation2 + $0x8] sm:$0xff]
      %v747 = vld [vmem:[#allocation2 + $0x10] sm:$0xff]
      %v748 = vld [vmem:[#allocation2 + $0x18] sm:$0xff]
      %v749 = vld [vmem:[#allocation2 + $0x20] sm:$0xff]
      %v750 = vld [vmem:[#allocation2 + $0x28] sm:$0xff]
      %v751 = vld [vmem:[#allocation2 + $0x30] sm:$0xff]
      %v752 = vld [vmem:[#allocation2 + $0x38] sm:$0xff]
      %v753 = vld [vmem:[#allocation2 + $0x40] sm:$0xff]
      %v754 = vld [vmem:[#allocation2 + $0x48] sm:$0xff]
      %v755 = vld [vmem:[#allocation2 + $0x50] sm:$0xff]
      %v756 = vld [vmem:[#allocation2 + $0x58] sm:$0xff]
      %v757 = vld [vmem:[#allocation2 + $0x60] sm:$0xff]
      %v758 = vld [vmem:[#allocation2 + $0x68] sm:$0xff]
      %v759 = vld [vmem:[#allocation2 + $0x70] sm:$0xff]
      %v760 = vld [vmem:[#allocation2 + $0x78] sm:$0xff]
      %v761 = vld [vmem:[#allocation2 + $0x80] sm:$0xff]
      %v762 = vld [vmem:[#allocation2 + $0x88] sm:$0xff]
      %v763 = vld [vmem:[#allocation2 + $0x90] sm:$0xff]
      %v764 = vld [vmem:[#allocation2 + $0x98] sm:$0xff]
      %v765 = vld [vmem:[#allocation2 + $0xa0] sm:$0xff]
      %v766 = vld [vmem:[#allocation2 + $0xa8] sm:$0xff]
      %v767 = vld [vmem:[#allocation2 + $0xb0] sm:$0xff]
      %v768 = vld [vmem:[#allocation2 + $0xb8] sm:$0xff]
      %v769 = vld [vmem:[#allocation2 + $0xc0] sm:$0xff]
      %v770 = vld [vmem:[#allocation2 + $0xc8] sm:$0xff]
      %v771 = vld [vmem:[#allocation2 + $0xd0] sm:$0xff]
      %v773 = vsel %vm370, %v744, 0
      %775 = vmatprep.subr.mxu0 %v746
      %776 = vmatpush1.msra.mxu0 %v745
      %777 = vmatprep.subr.mxu0 %v749
      %778 = vmatpush1.msra.mxu0 %v748
      %779 = vmatprep.subr.mxu0 %v752
      %780 = vmatpush1.msra.mxu0 %v751
      %781 = vmatprep.subr.mxu0 %v755
      %782 = vmatpush1.msra.mxu0 %v754
      %783 = vmatprep.subr.mxu0 %v758
      %784 = vmatpush1.msra.mxu0 %v757
      %785 = vmatprep.subr.mxu0 %v761
      %786 = vmatpush1.msra.mxu0 %v760
      %787 = vmatprep.subr.mxu0 %v764
      %788 = vmatpush1.msra.mxu0 %v763
      %789 = vmatprep.subr.mxu0 %v767
      %790 = vmatpush1.msra.mxu0 %v766
      %791 = vmatprep.subr.mxu0 %v770
      %792 = vmatpush1.msra.mxu0 %v769
      %793 = vmatprep.subr.mxu0 0.0
      %794 = vmatpush1.msra.mxu0 0.0
      %795 = vmatprep.subr.mxu0 0.0
      %796 = vmatpush1.msra.mxu0 0.0
      %797 = vmatprep.subr.mxu0 0.0
      %798 = vmatpush1.msra.mxu0 0.0
      %799 = vmatprep.subr.mxu0 0.0
      %800 = vmatpush1.msra.mxu0 0.0
      %801 = vmatprep.subr.mxu0 0.0
      %802 = vmatpush1.msra.mxu0 0.0
      %803 = vmatprep.subr.mxu0 0.0
      %804 = vmatpush1.msra.mxu0 0.0
      %805 = vmatprep.subr.mxu0 0.0
      %806 = vmatpush1.msra.mxu0 0.0
      %807 = vmatprep.subr.mxu0 0.0
      %808 = vmatpush1.msra.mxu0 0.0
      %809 = vmatprep.subr.mxu0 0.0
      %810 = vmatpush1.msra.mxu0 0.0
      %811 = vmatprep.subr.mxu0 0.0
      %812 = vmatpush1.msra.mxu0 0.0
      %813 = vmatprep.subr.mxu0 0.0
      %814 = vmatpush1.msra.mxu0 0.0
      %815 = vmatprep.subr.mxu0 0.0
      %816 = vmatpush1.msra.mxu0 0.0
      %817 = vmatprep.subr.mxu0 0.0
      %818 = vmatpush1.msra.mxu0 0.0
      %819 = vmatprep.subr.mxu0 0.0
      %820 = vmatpush1.msra.mxu0 0.0
      %821 = vmatprep.subr.mxu0 0.0
      %822 = vmatpush1.msra.mxu0 0.0
      %823 = vmatprep.subr.mxu0 0.0
      %824 = vmatpush1.msra.mxu0 0.0
      %825 = vmatprep.subr.mxu0 0.0
      %826 = vmatpush1.msra.mxu0 0.0
      %827 = vmatprep.subr.mxu0 0.0
      %828 = vmatpush1.msra.mxu0 0.0
      %829 = vmatprep.subr.mxu0 0.0
      %830 = vmatpush1.msra.mxu0 0.0
      %831 = vmatprep.subr.mxu0 0.0
      %832 = vmatpush1.msra.mxu0 0.0
      %833 = vmatprep.subr.mxu0 0.0
      %834 = vmatpush1.msra.mxu0 0.0
      %835 = vmatprep.subr.mxu0 0.0
      %836 = vmatpush1.msra.mxu0 0.0
      %837 = vmatprep.subr.mxu0 0.0
      %838 = vmatpush1.msra.mxu0 0.0
      %839 = vmatprep.mubr.f32.mxu0 0.0
      %840 = vmatmul.mubr.f32.gmra.mrb[0].mxu0 %v773
      %v841 = vpop.f32.mrb[0].mxu0
      %v842 = vadd.f32 0.0, %v841
      %v843 = vpop.f32.mrb[0].mxu0
      %v844 = vadd.f32 0.0, %v843
      %845 = vdwg.mxu0
      %846 = vmatprep.subr.mxu0 0.0
      %847 = vmatpush1.msra.mxu0 %v747
      %848 = vmatprep.subr.mxu0 0.0
      %849 = vmatpush1.msra.mxu0 %v750
      %850 = vmatprep.subr.mxu0 0.0
      %851 = vmatpush1.msra.mxu0 %v753
      %852 = vmatprep.subr.mxu0 0.0
      %853 = vmatpush1.msra.mxu0 %v756
      %854 = vmatprep.subr.mxu0 0.0
      %855 = vmatpush1.msra.mxu0 %v759
      %856 = vmatprep.subr.mxu0 0.0
      %857 = vmatpush1.msra.mxu0 %v762
      %858 = vmatprep.subr.mxu0 0.0
      %859 = vmatpush1.msra.mxu0 %v765
      %860 = vmatprep.subr.mxu0 0.0
      %861 = vmatpush1.msra.mxu0 %v768
      %862 = vmatprep.subr.mxu0 0.0
      %863 = vmatpush1.msra.mxu0 %v771
      %864 = vmatprep.subr.mxu0 0.0
      %865 = vmatpush1.msra.mxu0 0.0
      %866 = vmatprep.subr.mxu0 0.0
      %867 = vmatpush1.msra.mxu0 0.0
      %868 = vmatprep.subr.mxu0 0.0
      %869 = vmatpush1.msra.mxu0 0.0
      %870 = vmatprep.subr.mxu0 0.0
      %871 = vmatpush1.msra.mxu0 0.0
      %872 = vmatprep.subr.mxu0 0.0
      %873 = vmatpush1.msra.mxu0 0.0
      %874 = vmatprep.subr.mxu0 0.0
      %875 = vmatpush1.msra.mxu0 0.0
      %876 = vmatprep.subr.mxu0 0.0
      %877 = vmatpush1.msra.mxu0 0.0
      %878 = vmatprep.subr.mxu0 0.0
      %879 = vmatpush1.msra.mxu0 0.0
      %880 = vmatprep.subr.mxu0 0.0
      %881 = vmatpush1.msra.mxu0 0.0
      %882 = vmatprep.subr.mxu0 0.0
      %883 = vmatpush1.msra.mxu0 0.0
      %884 = vmatprep.subr.mxu0 0.0
      %885 = vmatpush1.msra.mxu0 0.0
      %886 = vmatprep.subr.mxu0 0.0
      %887 = vmatpush1.msra.mxu0 0.0
      %888 = vmatprep.subr.mxu0 0.0
      %889 = vmatpush1.msra.mxu0 0.0
      %890 = vmatprep.subr.mxu0 0.0
      %891 = vmatpush1.msra.mxu0 0.0
      %892 = vmatprep.subr.mxu0 0.0
      %893 = vmatpush1.msra.mxu0 0.0
      %894 = vmatprep.subr.mxu0 0.0
      %895 = vmatpush1.msra.mxu0 0.0
      %896 = vmatprep.subr.mxu0 0.0
      %897 = vmatpush1.msra.mxu0 0.0
      %898 = vmatprep.subr.mxu0 0.0
      %899 = vmatpush1.msra.mxu0 0.0
      %900 = vmatprep.subr.mxu0 0.0
      %901 = vmatpush1.msra.mxu0 0.0
      %902 = vmatprep.subr.mxu0 0.0
      %903 = vmatpush1.msra.mxu0 0.0
      %904 = vmatprep.subr.mxu0 0.0
      %905 = vmatpush1.msra.mxu0 0.0
      %906 = vmatprep.subr.mxu0 0.0
      %907 = vmatpush1.msra.mxu0 0.0
      %908 = vmatprep.subr.mxu0 0.0
      %909 = vmatpush1.msra.mxu0 0.0
      %910 = vmatprep.mubr.f32.mxu0 0.0
      %911 = vmatmul.mubr.f32.gmra.mrb[0].mxu0 %v773
      %v912 = vpop.f32.mrb[0].mxu0
      %v913 = vadd.f32 0.0, %v912
      %v914 = vpop.f32.mrb[0].mxu0
      %915 = vdwg.mxu0
      %v916 = vmul.f32 %v842, %v200
      %v917 = vmul.f32 %v844, %v201
      %v918 = vmul.f32 %v913, %v202
      %v919 = vsel %vm518, %v916, 0.0
      %v920 = vsel %vm518, %v917, 0.0
      %v921 = vadd.f32 %v919, %v920
      %v922 = vsel %vm518, %v918, 0.0
      %v923 = vadd.f32 %v921, %v922
      %924 = vadd.xlane.f32.xlu0 %v923
      %v925 = vpop.xlane.xlu0 %924
      %v926 = vmul.f32 %v916, %v842
      %v927 = vmul.f32 %v917, %v844
      %v928 = vmul.f32 %v918, %v913
      %v929 = vsel %vm518, %v926, 0.0
      %v930 = vsel %vm518, %v927, 0.0
      %v931 = vadd.f32 %v929, %v930
      %v932 = vsel %vm518, %v928, 0.0
      %v933 = vadd.f32 %v931, %v932
      %934 = vadd.xlane.f32.xlu0 %v933
      %v935 = vpop.xlane.xlu0 %934
      %v936 = vmul.f32 %v925, 0.00390625
      %v937 = vmul.f32 %v935, 0.00390625
      %v938 = vmul.f32 %v936, %v936
      %v939 = vsub.f32 %v937, %v938
      %v940 = vmax.f32 %v939, 0.0
      %v941 = vsub.f32 %v842, %v936
      %v942 = vsub.f32 %v844, %v936
      %v943 = vsub.f32 %v913, %v936
      %v944 = vadd.f32 %v940, 1e-05
      %v945 = vrsqrt.pop %v944
      %v946 = vmul.f32 %v941, %v945
      %v947 = vmul.f32 %v942, %v945
      %v948 = vmul.f32 %v943, %v945
      %v951 = vcombine.low %v946, %v947
      %953 = vst [vmem:[%s170] sm:$0xff] %v951
      %954 = vst [vmem:[%s170 + $0x8] sm:$0xf] %v948
      %p955 = scmp.lt.s32.totalorder %s14, 1
      %s956 = scalar_select %p955, %s14, 1
      %s957 = smul.addr %s956, 3
      %s958 = smul.addr %s957, 4
      %s959 = scalar_lea.vmem %s3, %s958
      // Predicated region
      $region33: #{resnet_block_forward.1} parent=31 // pred_check
        %p960 = pneg %p100
      $region34: #{resnet_block_forward.1} parent=31 // pred_check_branch
        %962 = sbr.rel (%p960) target = $region36
      $region35: #{resnet_block_forward.1} parent=31 // pred_region
        _
      $region36: #{resnet_block_forward.1} parent=31 // pred_fallthru
        _
    $region32: #{resnet_block_forward.1} parent=5 // pred_fallthru
      _
    %p963 = scmp.le.s32.totalorder 2, %s9
    // Predicated region
    $region37: #{resnet_block_forward.1} parent=5 // pred_check
      %p964 = pneg %p963
    $region38: #{resnet_block_forward.1} parent=5 // pred_check_branch
      %966 = sbr.rel (%p964) target = $region40
    $region39: #{resnet_block_forward.1} parent=5 // pred_region
      %s967 = ssub.s32 %s9, 2
      // Predicated region
      $region41: #{resnet_block_forward.1} parent=39 // pred_check
        %p968 = pneg %p106
      $region42: #{resnet_block_forward.1} parent=39 // pred_check_branch
        %970 = sbr.rel (%p968) target = $region44
      $region43: #{resnet_block_forward.1} parent=39 // pred_region
        %p971 = scmp.lt.s32.totalorder %s15, 1
        %s972 = scalar_select %p971, %s15, 1
        %s973 = smul.addr %s972, 3
        %s974 = smul.addr %s973, 4
        %s975 = scalar_lea.vmem %s3, %s974
      $region44: #{resnet_block_forward.1} parent=39 // pred_fallthru
        _
    $region40: #{resnet_block_forward.1} parent=5 // pred_fallthru
      _
  $region6: #{resnet_block_forward.1} parent=0 // loop_footer
    %s13 = sadd.s32 1, %s9
  $region7: #{resnet_block_forward.1} parent=0 // loop_footer_branch
    %8 = sbr.rel target = $region3
  $region8: #{resnet_block_forward.1} parent=0 // loop_exit
    _

</llo_original>
